<compile_context>
chip_gen: v7x
topology: tpu7x:2x2x1
jax: 0.10.0
libtpu: 0.0.40
codegen_flags: <defaults>
</compile_context>

<pallas_src>
import functools

import jax
import jax.numpy as jnp
from jax.experimental import pallas as pl
from jax.experimental.pallas import tpu as pltpu


def _round_up(x, m):
    return ((x + m - 1) // m) * m


# ---------------------------------------------------------------------------
# Fused kernel: one batch element per program.
# ---------------------------------------------------------------------------
def _cab_fused_kernel(x_ref, w1_ref, b1_ref, w2_ref, b2_ref,
                      wdu1_ref, bdu1_ref, wdu2_ref, bdu2_ref, mask_ref,
                      o_ref, h1ext_ref, *, K, Wp, E, inv_hw):
    # x_ref     : (C, We)      zero-extended, flattened, zero-padded input
    # w1_ref    : (C, K*K*C)   conv1 weight, taps folded into the contraction
    # b1_ref    : (C, 1)
    # w2_ref    : (C, K*K*C)   conv2 weight, taps folded
    # b2_ref    : (C, 1)
    # wdu1_ref  : (C, Cr)      CA squeeze 1x1 weight (transposed)
    # bdu1_ref  : (1, Cr)
    # wdu2_ref  : (C, Cr)      CA excite 1x1 weight
    # bdu2_ref  : (C, 1)
    # mask_ref  : (1, Lp)      1.0 at valid interior spatial positions, else 0.0
    # o_ref     : (C, Lp)      Lp = round_up(Hp*Wp, 128)
    # h1ext_ref : (C, We)      VMEM scratch: conv1 output, zero-extended layout
    C, Lp = o_ref.shape
    We = h1ext_ref.shape[-1]
    base = E - (K // 2) * Wp - (K // 2)        # window start of tap (0, 0)
    mask = mask_ref[...]

    def folded_conv(src, w_ref, b_ref, relu):
        # Stack the K*K shifted spatial windows along sublanes, then a single
        # deep-contraction MXU matmul (contraction = K*K*C).
        slices = []
        for dy in range(K):                    # static, unrolled (K*K small)
            for dx in range(K):
                off = base + dy * Wp + dx      # static lane offset
                slices.append(src[:, off:off + Lp])
        xcat = jnp.concatenate(slices, axis=0)                     # (K*K*C, Lp)
        acc = jnp.dot(w_ref[...], xcat, preferred_element_type=jnp.float32)
        acc = acc + b_ref[...]
        if relu:
            acc = jnp.maximum(acc, 0.0)
        # Zero the spatial padding ring / lane tail so the result can feed the
        # next conv and the global average pool without extra masking.
        return acc * mask

    # ---- body: conv1 -> ReLU  (TODO(synk): act assumed ReLU) ----
    h1 = folded_conv(x_ref[...], w1_ref, b1_ref, relu=True)        # (C, Lp) f32

    # Stage h1 in VMEM in the zero-extended layout (no HBM round trip, no XLA
    # pad).  E, Lp, We-E-Lp are all multiples of 128 -> lane-aligned stores.
    if E > 0:
        h1ext_ref[:, 0:E] = jnp.zeros((C, E), h1ext_ref.dtype)
    h1ext_ref[:, E:E + Lp] = h1
    if We > E + Lp:
        h1ext_ref[:, E + Lp:We] = jnp.zeros((C, We - E - Lp), h1ext_ref.dtype)

    # ---- body: conv2 ----
    res = folded_conv(h1ext_ref[...], w2_ref, b2_ref, relu=False)  # (C, Lp) f32

    # ---- channel attention: avg pool -> 1x1 -> ReLU -> 1x1 -> sigmoid ----
    # pads/ring are exactly zero, so a plain lane-sum / (H*W) is exact.
    y = jnp.sum(res, axis=1, keepdims=True) * inv_hw                        # (C, 1)
    z = jnp.sum(wdu1_ref[...] * y, axis=0, keepdims=True) + bdu1_ref[...]   # (1, Cr)
    z = jnp.maximum(z, 0.0)
    t = jnp.sum(wdu2_ref[...] * z, axis=1, keepdims=True) + bdu2_ref[...]   # (C, 1)
    gate = 1.0 / (1.0 + jnp.exp(-t))                                        # sigmoid

    # ---- scale + residual (E is a multiple of 128 -> aligned lane slice) ----
    xr = x_ref[:, E:E + Lp].astype(jnp.float32)
    o_ref[...] = (res * gate + xr).astype(o_ref.dtype)


# ---------------------------------------------------------------------------
# Wrapper
# ---------------------------------------------------------------------------
def _vmem_limit(est_bytes):
    # ~75% of physical VMEM if queryable; 48 MiB fallback (safe on v7x 64 MiB).
    cap = 48 << 20
    try:
        info = pltpu.get_tpu_info()
        phys = getattr(info, "vmem_capacity_bytes", None)
        if phys:
            cap = int(phys) * 3 // 4
    except Exception:
        pass
    want = int(est_bytes) + (8 << 20)
    return min(max(32 << 20, want), cap)


def cab_pallas(x, conv1_w, conv1_b, conv2_w, conv2_b,
               du1_w, du1_b, du2_w, du2_b):
    """CAB forward pass (act = ReLU).

    x       : (N, C, H, W)                    NCHW, like PyTorch
    conv*_w : (C, C, K, K),  conv*_b : (C,)   body convs (padding = K//2)
    du1_w   : (Cr, C, 1, 1), du1_b : (Cr,)    CA squeeze 1x1
    du2_w   : (C, Cr, 1, 1), du2_b : (C,)     CA excite 1x1
    returns : (N, C, H, W)
    """
    N, C, H, W = x.shape
    K = conv1_w.shape[-1]
    p = K // 2
    Hp, Wp = H + 2 * p, W + 2 * p
    L = Hp * Wp
    Lp = _round_up(L, 128)              # lane-dense flattened padded spatial
    start = p * Wp + p                  # offset of output pixel (0,0)
    E = _round_up(start, 128)           # left zero-extension (lane aligned)
    Er = _round_up(start, 128)          # right zero-extension
    We = E + Lp + Er                    # multiple of 128
    Cr = du1_w.shape[0]
    Cp = _round_up(C, 8)                # channel pad: clean sublane tiling
    KK = K * K
    cpad = Cp - C
    f32 = jnp.float32

    def pad_c(a, axes):
        pads = [(0, 0)] * a.ndim
        for ax in axes:
            pads[ax] = (0, cpad)
        return jnp.pad(a, pads)

    # ---- parameter plumbing (tiny, done once in XLA) ----
    x_p = pad_c(x.astype(f32), (1,))                               # (N, Cp, H, W)
    w1 = pad_c(conv1_w.astype(f32), (0, 1))                        # (Cp, Cp, K, K)
    w2 = pad_c(conv2_w.astype(f32), (0, 1))
    b1 = pad_c(conv1_b.astype(f32), (0,)).reshape(Cp, 1)
    b2 = pad_c(conv2_b.astype(f32), (0,)).reshape(Cp, 1)
    d1w = pad_c(du1_w.astype(f32).reshape(Cr, C), (1,))            # (Cr, Cp)
    d2w = pad_c(du2_w.astype(f32).reshape(C, Cr), (0,))            # (Cp, Cr)
    d1b = du1_b.astype(f32).reshape(1, Cr)
    d2b = pad_c(du2_b.astype(f32), (0,)).reshape(Cp, 1)

    def fold_w(w):   # (Cout, Cin, K, K) -> (Cout, K*K*Cin), tap-major rows
        return jnp.transpose(w, (0, 2, 3, 1)).reshape(Cp, KK * Cp)

    w1f, w2f = fold_w(w1), fold_w(w2)
    wdu1t = d1w.T                                                   # (Cp, Cr)

    # ---- activation plumbing: pads / reshapes only, NO transposes ----
    x_padf = jnp.pad(x_p, ((0, 0), (0, 0), (p, p), (p, p))).reshape(N, Cp, L)
    x_ext = jnp.pad(x_padf, ((0, 0), (0, 0), (E, We - E - L)))      # (N, Cp, We)
    mask = jnp.pad(jnp.ones((H, W), f32), ((p, p), (p, p))).reshape(1, L)
    mask = jnp.pad(mask, ((0, 0), (0, Lp - L)))                     # (1, Lp)

    kernel = functools.partial(_cab_fused_kernel, K=K, Wp=Wp, E=E,
                               inv_hw=1.0 / (H * W))

    est = 4 * (3 * Cp * We            # x_ext (2 bufs) + h1ext scratch
               + 2 * Cp * Lp          # output (2 bufs)
               + 4 * KK * Cp * Cp     # folded conv weights (2 bufs each)
               + KK * Cp * Lp         # stacked-slice matmul operand
               + 4 * Cp * Lp)         # h1 / res / misc intermediates

    out = pl.pallas_call(
        kernel,
        out_shape=jax.ShapeDtypeStruct((N, Cp, Lp), f32),
        grid_spec=pltpu.PrefetchScalarGridSpec(
            num_scalar_prefetch=0,
            grid=(N,),
            in_specs=[
                pl.BlockSpec((None, Cp, We), lambda n: (n, 0, 0)),
                pl.BlockSpec((Cp, KK * Cp), lambda n: (0, 0)),
                pl.BlockSpec((Cp, 1), lambda n: (0, 0)),
                pl.BlockSpec((Cp, KK * Cp), lambda n: (0, 0)),
                pl.BlockSpec((Cp, 1), lambda n: (0, 0)),
                pl.BlockSpec((Cp, Cr), lambda n: (0, 0)),
                pl.BlockSpec((1, Cr), lambda n: (0, 0)),
                pl.BlockSpec((Cp, Cr), lambda n: (0, 0)),
                pl.BlockSpec((Cp, 1), lambda n: (0, 0)),
                pl.BlockSpec((1, Lp), lambda n: (0, 0)),
            ],
            out_specs=pl.BlockSpec((None, Cp, Lp), lambda n: (n, 0, 0)),
            scratch_shapes=[pltpu.VMEM((Cp, We), f32)],
        ),
        compiler_params=pltpu.CompilerParams(
            dimension_semantics=("parallel",),
            vmem_limit_bytes=_vmem_limit(est),
        ),
    )(x_ext, w1f, b1, w2f, b2, wdu1t, d1b, d2w, d2b, mask)

    # strip channel padding, lane-padding tail, and the spatial padding ring
    return out[:, :C, :L].reshape(N, C, Hp, Wp)[:, :, p:p + H, p:p + W]


if __name__ == "__main__":
    key = jax.random.PRNGKey(0)
    ks = jax.random.split(key, 9)

    N, C, H, W = 2, 8, 16, 16
    K, reduction = 3, 4
    Cr = C // reduction

    x = jax.random.normal(ks[0], (N, C, H, W), jnp.float32)

    def uni(k, shape, fan_in):
        b = 1.0 / (fan_in ** 0.5)
        return jax.random.uniform(k, shape, jnp.float32, -b, b)

    conv1_w = uni(ks[1], (C, C, K, K), C * K * K)
    conv1_b = uni(ks[2], (C,), C * K * K)
    conv2_w = uni(ks[3], (C, C, K, K), C * K * K)
    conv2_b = uni(ks[4], (C,), C * K * K)
    du1_w = uni(ks[5], (Cr, C, 1, 1), C)
    du1_b = uni(ks[6], (Cr,), C)
    du2_w = uni(ks[7], (C, Cr, 1, 1), Cr)
    du2_b = uni(ks[8], (C,), Cr)

    cab = jax.jit(cab_pallas)
    out = cab(x, conv1_w, conv1_b, conv2_w, conv2_b, du1_w, du1_b, du2_w, du2_b)
    out = jax.block_until_ready(out)

    # ---- pure-JAX reference for CAB forward (act = ReLU) ----
    def conv2d(inp, w, b):
        y = jax.lax.conv_general_dilated(
            inp, w, window_strides=(1, 1),
            padding=[(K // 2, K // 2), (K // 2, K // 2)],
            dimension_numbers=("NCHW", "OIHW", "NCHW"),
            precision=jax.lax.Precision.HIGHEST)
        return y + b[None, :, None, None]

    r = jnp.maximum(conv2d(x, conv1_w, conv1_b), 0.0)
    r = conv2d(r, conv2_w, conv2_b)
    y = jnp.mean(r, axis=(2, 3), keepdims=True)
    z = jnp.einsum("oc,nchw->nohw", du1_w.reshape(Cr, C), y,
                   precision=jax.lax.Precision.HIGHEST) + du1_b[None, :, None, None]
    z = jnp.maximum(z, 0.0)
    t = jnp.einsum("oc,nchw->nohw", du2_w.reshape(C, Cr), z,
                   precision=jax.lax.Precision.HIGHEST) + du2_b[None, :, None, None]
    ref = r * jax.nn.sigmoid(t) + x

    assert out.shape == (N, C, H, W)
    err = float(jnp.max(jnp.abs(out - ref)))
    assert jnp.allclose(out, ref, atol=2e-3, rtol=2e-3), f"max abs err {err}"

    print("KERNEL_OK")
</pallas_src>

<mosaic_0001>
module attributes {stable_mosaic.version = 11 : i64} {
  func.func @_cab_fused_kernel(%arg0: i32, %arg1: memref<1x8x640xf32, #tpu.memory_space<vmem>>, %arg2: memref<8x72xf32, #tpu.memory_space<vmem>>, %arg3: memref<8x1xf32, #tpu.memory_space<vmem>>, %arg4: memref<8x72xf32, #tpu.memory_space<vmem>>, %arg5: memref<8x1xf32, #tpu.memory_space<vmem>>, %arg6: memref<8x2xf32, #tpu.memory_space<vmem>>, %arg7: memref<1x2xf32, #tpu.memory_space<vmem>>, %arg8: memref<8x2xf32, #tpu.memory_space<vmem>>, %arg9: memref<8x1xf32, #tpu.memory_space<vmem>>, %arg10: memref<1x384xf32, #tpu.memory_space<vmem>>, %arg11: memref<1x8x384xf32, #tpu.memory_space<vmem>>, %arg12: memref<8x640xf32, #tpu.memory_space<vmem>>) attributes {dimension_semantics = [#tpu.dimension_semantics<parallel>], iteration_bounds = array<i64: 2>, scalar_prefetch = 0 : i64, scratch_operands = 1 : i64, tpu.core_type = #tpu.core_type<tc>, window_params = [{transform_indices = @transform_0, window_bounds = array<i64: 1, 8, 640>}, {pipeline_mode = #tpu.pipeline_mode<synchronous>, transform_indices = @transform_1, window_bounds = array<i64: 8, 72>}, {pipeline_mode = #tpu.pipeline_mode<synchronous>, transform_indices = @transform_2, window_bounds = array<i64: 8, 1>}, {pipeline_mode = #tpu.pipeline_mode<synchronous>, transform_indices = @transform_3, window_bounds = array<i64: 8, 72>}, {pipeline_mode = #tpu.pipeline_mode<synchronous>, transform_indices = @transform_4, window_bounds = array<i64: 8, 1>}, {pipeline_mode = #tpu.pipeline_mode<synchronous>, transform_indices = @transform_5, window_bounds = array<i64: 8, 2>}, {pipeline_mode = #tpu.pipeline_mode<synchronous>, transform_indices = @transform_6, window_bounds = array<i64: 1, 2>}, {pipeline_mode = #tpu.pipeline_mode<synchronous>, transform_indices = @transform_7, window_bounds = array<i64: 8, 2>}, {pipeline_mode = #tpu.pipeline_mode<synchronous>, transform_indices = @transform_8, window_bounds = array<i64: 8, 1>}, {pipeline_mode = #tpu.pipeline_mode<synchronous>, transform_indices = @transform_9, window_bounds = array<i64: 1, 384>}, {transform_indices = @transform_10, window_bounds = array<i64: 1, 8, 384>}]} {
    %c0 = arith.constant 0 : index
    %c0_0 = arith.constant 0 : index
    %0 = vector.load %arg10[%c0, %c0_0] : memref<1x384xf32, #tpu.memory_space<vmem>>, vector<1x384xf32>
    %c0_1 = arith.constant 0 : index
    %c0_2 = arith.constant 0 : index
    %c0_3 = arith.constant 0 : index
    %1 = vector.load %arg1[%c0_1, %c0_2, %c0_3] : memref<1x8x640xf32, #tpu.memory_space<vmem>>, vector<1x8x640xf32>
    %2 = vector.shape_cast %1 : vector<1x8x640xf32> to vector<8x640xf32>
    %3 = vector.extract_strided_slice %2 {offsets = [0, 109], sizes = [8, 384], strides = [1, 1]} : vector<8x640xf32> to vector<8x384xf32>
    %4 = vector.extract_strided_slice %2 {offsets = [0, 110], sizes = [8, 384], strides = [1, 1]} : vector<8x640xf32> to vector<8x384xf32>
    %5 = vector.extract_strided_slice %2 {offsets = [0, 111], sizes = [8, 384], strides = [1, 1]} : vector<8x640xf32> to vector<8x384xf32>
    %6 = vector.extract_strided_slice %2 {offsets = [0, 127], sizes = [8, 384], strides = [1, 1]} : vector<8x640xf32> to vector<8x384xf32>
    %7 = vector.extract_strided_slice %2 {offsets = [0, 128], sizes = [8, 384], strides = [1, 1]} : vector<8x640xf32> to vector<8x384xf32>
    %8 = vector.extract_strided_slice %2 {offsets = [0, 129], sizes = [8, 384], strides = [1, 1]} : vector<8x640xf32> to vector<8x384xf32>
    %9 = vector.extract_strided_slice %2 {offsets = [0, 145], sizes = [8, 384], strides = [1, 1]} : vector<8x640xf32> to vector<8x384xf32>
    %10 = vector.extract_strided_slice %2 {offsets = [0, 146], sizes = [8, 384], strides = [1, 1]} : vector<8x640xf32> to vector<8x384xf32>
    %11 = vector.extract_strided_slice %2 {offsets = [0, 147], sizes = [8, 384], strides = [1, 1]} : vector<8x640xf32> to vector<8x384xf32>
    %12 = tpu.concatenate %3, %4, %5, %6, %7, %8, %9, %10, %11 in 0 : vector<8x384xf32>, vector<8x384xf32>, vector<8x384xf32>, vector<8x384xf32>, vector<8x384xf32>, vector<8x384xf32>, vector<8x384xf32>, vector<8x384xf32>, vector<8x384xf32> -> vector<72x384xf32>
    %c0_4 = arith.constant 0 : index
    %c0_5 = arith.constant 0 : index
    %13 = vector.load %arg2[%c0_4, %c0_5] : memref<8x72xf32, #tpu.memory_space<vmem>>, vector<8x72xf32>
    %cst = arith.constant dense<0.000000e+00> : vector<8x384xf32>
    %14 = tpu.matmul %13, %12, %cst {dimension_numbers = #tpu.dot_dimension_numbers<[1], [0], [0], [1], [0, 0, 1, 1], [], []>} : vector<8x72xf32>, vector<72x384xf32>, vector<8x384xf32> -> vector<8x384xf32>
    %c0_6 = arith.constant 0 : index
    %c0_7 = arith.constant 0 : index
    %15 = vector.load %arg3[%c0_6, %c0_7] : memref<8x1xf32, #tpu.memory_space<vmem>>, vector<8x1xf32>
    %16 = vector.broadcast %15 : vector<8x1xf32> to vector<8x384xf32>
    %17 = arith.addf %14, %16 : vector<8x384xf32>
    %cst_8 = arith.constant 0.000000e+00 : f32
    %18 = vector.broadcast %cst_8 : f32 to vector<8x384xf32>
    %19 = arith.maximumf %17, %18 : vector<8x384xf32>
    %20 = vector.broadcast %0 : vector<1x384xf32> to vector<8x384xf32>
    %21 = arith.mulf %19, %20 : vector<8x384xf32>
    %cst_9 = arith.constant 0.000000e+00 : f32
    %22 = vector.broadcast %cst_9 : f32 to vector<8x128xf32>
    %c0_10 = arith.constant 0 : index
    %c0_11 = arith.constant 0 : index
    %23 = vector.load %arg12[%c0_10, %c0_11] : memref<8x640xf32, #tpu.memory_space<vmem>>, vector<8x128xf32>
    tpu.vector_store %arg12[%c0_10, %c0_11], %22 {strides = array<i32>} : memref<8x640xf32, #tpu.memory_space<vmem>>, vector<8x128xf32>,
    %c0_12 = arith.constant 0 : index
    %c128 = arith.constant 128 : index
    %24 = vector.load %arg12[%c0_12, %c128] : memref<8x640xf32, #tpu.memory_space<vmem>>, vector<8x384xf32>
    tpu.vector_store %arg12[%c0_12, %c128], %21 {strides = array<i32>} : memref<8x640xf32, #tpu.memory_space<vmem>>, vector<8x384xf32>,
    %cst_13 = arith.constant 0.000000e+00 : f32
    %25 = vector.broadcast %cst_13 : f32 to vector<8x128xf32>
    %c0_14 = arith.constant 0 : index
    %c512 = arith.constant 512 : index
    %26 = vector.load %arg12[%c0_14, %c512] : memref<8x640xf32, #tpu.memory_space<vmem>>, vector<8x128xf32>
    tpu.vector_store %arg12[%c0_14, %c512], %25 {strides = array<i32>} : memref<8x640xf32, #tpu.memory_space<vmem>>, vector<8x128xf32>,
    %c0_15 = arith.constant 0 : index
    %c0_16 = arith.constant 0 : index
    %27 = vector.load %arg12[%c0_15, %c0_16] : memref<8x640xf32, #tpu.memory_space<vmem>>, vector<8x640xf32>
    %28 = vector.extract_strided_slice %27 {offsets = [0, 109], sizes = [8, 384], strides = [1, 1]} : vector<8x640xf32> to vector<8x384xf32>
    %29 = vector.extract_strided_slice %27 {offsets = [0, 110], sizes = [8, 384], strides = [1, 1]} : vector<8x640xf32> to vector<8x384xf32>
    %30 = vector.extract_strided_slice %27 {offsets = [0, 111], sizes = [8, 384], strides = [1, 1]} : vector<8x640xf32> to vector<8x384xf32>
    %31 = vector.extract_strided_slice %27 {offsets = [0, 127], sizes = [8, 384], strides = [1, 1]} : vector<8x640xf32> to vector<8x384xf32>
    %32 = vector.extract_strided_slice %27 {offsets = [0, 128], sizes = [8, 384], strides = [1, 1]} : vector<8x640xf32> to vector<8x384xf32>
    %33 = vector.extract_strided_slice %27 {offsets = [0, 129], sizes = [8, 384], strides = [1, 1]} : vector<8x640xf32> to vector<8x384xf32>
    %34 = vector.extract_strided_slice %27 {offsets = [0, 145], sizes = [8, 384], strides = [1, 1]} : vector<8x640xf32> to vector<8x384xf32>
    %35 = vector.extract_strided_slice %27 {offsets = [0, 146], sizes = [8, 384], strides = [1, 1]} : vector<8x640xf32> to vector<8x384xf32>
    %36 = vector.extract_strided_slice %27 {offsets = [0, 147], sizes = [8, 384], strides = [1, 1]} : vector<8x640xf32> to vector<8x384xf32>
    %37 = tpu.concatenate %28, %29, %30, %31, %32, %33, %34, %35, %36 in 0 : vector<8x384xf32>, vector<8x384xf32>, vector<8x384xf32>, vector<8x384xf32>, vector<8x384xf32>, vector<8x384xf32>, vector<8x384xf32>, vector<8x384xf32>, vector<8x384xf32> -> vector<72x384xf32>
    %c0_17 = arith.constant 0 : index
    %c0_18 = arith.constant 0 : index
    %38 = vector.load %arg4[%c0_17, %c0_18] : memref<8x72xf32, #tpu.memory_space<vmem>>, vector<8x72xf32>
    %cst_19 = arith.constant dense<0.000000e+00> : vector<8x384xf32>
    %39 = tpu.matmul %38, %37, %cst_19 {dimension_numbers = #tpu.dot_dimension_numbers<[1], [0], [0], [1], [0, 0, 1, 1], [], []>} : vector<8x72xf32>, vector<72x384xf32>, vector<8x384xf32> -> vector<8x384xf32>
    %c0_20 = arith.constant 0 : index
    %c0_21 = arith.constant 0 : index
    %40 = vector.load %arg5[%c0_20, %c0_21] : memref<8x1xf32, #tpu.memory_space<vmem>>, vector<8x1xf32>
    %41 = vector.broadcast %40 : vector<8x1xf32> to vector<8x384xf32>
    %42 = arith.addf %39, %41 : vector<8x384xf32>
    %43 = vector.broadcast %0 : vector<1x384xf32> to vector<8x384xf32>
    %44 = arith.mulf %42, %43 : vector<8x384xf32>
    %cst_22 = arith.constant dense<0.000000e+00> : vector<8xf32>
    %45 = vector.multi_reduction <add>, %44, %cst_22 [1] : vector<8x384xf32> to vector<8xf32>
    %46 = vector.shape_cast %45 : vector<8xf32> to vector<8x1xf32>
    %cst_23 = arith.constant 3.906250e-03 : f32
    %47 = vector.broadcast %cst_23 : f32 to vector<8x1xf32>
    %48 = arith.mulf %46, %47 : vector<8x1xf32>
    %c0_24 = arith.constant 0 : index
    %c0_25 = arith.constant 0 : index
    %49 = vector.load %arg6[%c0_24, %c0_25] : memref<8x2xf32, #tpu.memory_space<vmem>>, vector<8x2xf32>
    %50 = vector.broadcast %48 : vector<8x1xf32> to vector<8x2xf32>
    %51 = arith.mulf %49, %50 : vector<8x2xf32>
    %cst_26 = arith.constant dense<0.000000e+00> : vector<2xf32>
    %52 = vector.multi_reduction <add>, %51, %cst_26 [0] : vector<8x2xf32> to vector<2xf32>
    %53 = vector.shape_cast %52 : vector<2xf32> to vector<1x2xf32>
    %c0_27 = arith.constant 0 : index
    %c0_28 = arith.constant 0 : index
    %54 = vector.load %arg7[%c0_27, %c0_28] : memref<1x2xf32, #tpu.memory_space<vmem>>, vector<1x2xf32>
    %55 = arith.addf %53, %54 : vector<1x2xf32>
    %cst_29 = arith.constant 0.000000e+00 : f32
    %56 = vector.broadcast %cst_29 : f32 to vector<1x2xf32>
    %57 = arith.maximumf %55, %56 : vector<1x2xf32>
    %c0_30 = arith.constant 0 : index
    %c0_31 = arith.constant 0 : index
    %58 = vector.load %arg8[%c0_30, %c0_31] : memref<8x2xf32, #tpu.memory_space<vmem>>, vector<8x2xf32>
    %59 = vector.broadcast %57 : vector<1x2xf32> to vector<8x2xf32>
    %60 = arith.mulf %58, %59 : vector<8x2xf32>
    %cst_32 = arith.constant dense<0.000000e+00> : vector<8xf32>
    %61 = vector.multi_reduction <add>, %60, %cst_32 [1] : vector<8x2xf32> to vector<8xf32>
    %62 = vector.shape_cast %61 : vector<8xf32> to vector<8x1xf32>
    %c0_33 = arith.constant 0 : index
    %c0_34 = arith.constant 0 : index
    %63 = vector.load %arg9[%c0_33, %c0_34] : memref<8x1xf32, #tpu.memory_space<vmem>>, vector<8x1xf32>
    %64 = arith.addf %62, %63 : vector<8x1xf32>
    %cst_35 = arith.constant 0.000000e+00 : f32
    %65 = vector.broadcast %cst_35 : f32 to vector<8x1xf32>
    %66 = arith.subf %65, %64 : vector<8x1xf32>
    %67 = math.exp %66 : vector<8x1xf32>
    %cst_36 = arith.constant 1.000000e+00 : f32
    %68 = vector.broadcast %cst_36 : f32 to vector<8x1xf32>
    %69 = arith.addf %68, %67 : vector<8x1xf32>
    %cst_37 = arith.constant 1.000000e+00 : f32
    %70 = vector.broadcast %cst_37 : f32 to vector<8x1xf32>
    %71 = arith.divf %70, %69 : vector<8x1xf32>
    %c0_38 = arith.constant 0 : index
    %c0_39 = arith.constant 0 : index
    %c128_40 = arith.constant 128 : index
    %72 = vector.load %arg1[%c0_38, %c0_39, %c128_40] : memref<1x8x640xf32, #tpu.memory_space<vmem>>, vector<1x8x384xf32>
    %73 = vector.shape_cast %72 : vector<1x8x384xf32> to vector<8x384xf32>
    %74 = vector.broadcast %71 : vector<8x1xf32> to vector<8x384xf32>
    %75 = arith.mulf %44, %74 : vector<8x384xf32>
    %76 = arith.addf %75, %73 : vector<8x384xf32>
    %c0_41 = arith.constant 0 : index
    %c0_42 = arith.constant 0 : index
    %c0_43 = arith.constant 0 : index
    %77 = vector.load %arg11[%c0_41, %c0_42, %c0_43] : memref<1x8x384xf32, #tpu.memory_space<vmem>>, vector<1x8x384xf32>
    %78 = vector.shape_cast %77 : vector<1x8x384xf32> to vector<8x384xf32>
    %79 = vector.shape_cast %76 : vector<8x384xf32> to vector<1x8x384xf32>
    tpu.vector_store %arg11[%c0_41, %c0_42, %c0_43], %79 {strides = array<i32>} : memref<1x8x384xf32, #tpu.memory_space<vmem>>, vector<1x8x384xf32>,
    return
  }
  func.func @transform_0(%arg0: i32) -> (i32, i32, i32) {
    %c0_i32 = arith.constant 0 : i32
    %c0_i32_0 = arith.constant 0 : i32
    %c0_i32_1 = arith.constant 0 : i32
    return %arg0, %c0_i32, %c0_i32_0 : i32, i32, i32
  }
  func.func @transform_1(%arg0: i32) -> (i32, i32) {
    %c0_i32 = arith.constant 0 : i32
    %c0_i32_0 = arith.constant 0 : i32
    %c0_i32_1 = arith.constant 0 : i32
    return %c0_i32, %c0_i32_0 : i32, i32
  }
  func.func @transform_2(%arg0: i32) -> (i32, i32) {
    %c0_i32 = arith.constant 0 : i32
    %c0_i32_0 = arith.constant 0 : i32
    %c0_i32_1 = arith.constant 0 : i32
    return %c0_i32, %c0_i32_0 : i32, i32
  }
  func.func @transform_3(%arg0: i32) -> (i32, i32) {
    %c0_i32 = arith.constant 0 : i32
    %c0_i32_0 = arith.constant 0 : i32
    %c0_i32_1 = arith.constant 0 : i32
    return %c0_i32, %c0_i32_0 : i32, i32
  }
  func.func @transform_4(%arg0: i32) -> (i32, i32) {
    %c0_i32 = arith.constant 0 : i32
    %c0_i32_0 = arith.constant 0 : i32
    %c0_i32_1 = arith.constant 0 : i32
    return %c0_i32, %c0_i32_0 : i32, i32
  }
  func.func @transform_5(%arg0: i32) -> (i32, i32) {
    %c0_i32 = arith.constant 0 : i32
    %c0_i32_0 = arith.constant 0 : i32
    %c0_i32_1 = arith.constant 0 : i32
    return %c0_i32, %c0_i32_0 : i32, i32
  }
  func.func @transform_6(%arg0: i32) -> (i32, i32) {
    %c0_i32 = arith.constant 0 : i32
    %c0_i32_0 = arith.constant 0 : i32
    %c0_i32_1 = arith.constant 0 : i32
    return %c0_i32, %c0_i32_0 : i32, i32
  }
  func.func @transform_7(%arg0: i32) -> (i32, i32) {
    %c0_i32 = arith.constant 0 : i32
    %c0_i32_0 = arith.constant 0 : i32
    %c0_i32_1 = arith.constant 0 : i32
    return %c0_i32, %c0_i32_0 : i32, i32
  }
  func.func @transform_8(%arg0: i32) -> (i32, i32) {
    %c0_i32 = arith.constant 0 : i32
    %c0_i32_0 = arith.constant 0 : i32
    %c0_i32_1 = arith.constant 0 : i32
    return %c0_i32, %c0_i32_0 : i32, i32
  }
  func.func @transform_9(%arg0: i32) -> (i32, i32) {
    %c0_i32 = arith.constant 0 : i32
    %c0_i32_0 = arith.constant 0 : i32
    %c0_i32_1 = arith.constant 0 : i32
    return %c0_i32, %c0_i32_0 : i32, i32
  }
  func.func @transform_10(%arg0: i32) -> (i32, i32, i32) {
    %c0_i32 = arith.constant 0 : i32
    %c0_i32_0 = arith.constant 0 : i32
    %c0_i32_1 = arith.constant 0 : i32
    return %arg0, %c0_i32, %c0_i32_0 : i32, i32, i32
  }
}

</mosaic_0001>

<llo_original>
// kernel: cab_pallas.1
$region0: #{cab_pallas.1}
  #allocation0 [shape = 'u32[]', space=smem, size = 0x4, offset = 0x4, fixed_abs, tag = 'smem constant byte address 0x4 - core index']
  #allocation1 [shape = 'u32[144,128]{1,0:T(1,128)}', space=vmem, size = 0x12000, scoped, tag = 'internal scratch']
  #allocation2 [shape = 'f32[8,640]{1,0:T(8,128)}', space=vmem, size = 0x5000, scoped, tag = 'scratch operand']
  %s0 = inlined_call_operand.vmem [shape: f32[2,8,640], index: 0, kind: input, shape index: {}]
  %s1 = inlined_call_operand.vmem [shape: f32[8,72], index: 1, kind: input, shape index: {}]
  %s2 = inlined_call_operand.vmem [shape: f32[8,1], index: 2, kind: input, shape index: {}]
  %s3 = inlined_call_operand.vmem [shape: f32[8,72], index: 3, kind: input, shape index: {}]
  %s4 = inlined_call_operand.vmem [shape: f32[8,1], index: 4, kind: input, shape index: {}]
  %s5 = inlined_call_operand.vmem [shape: f32[8,2], index: 5, kind: input, shape index: {}]
  %s6 = inlined_call_operand.vmem [shape: f32[1,2], index: 6, kind: input, shape index: {}]
  %s7 = inlined_call_operand.vmem [shape: f32[8,2], index: 7, kind: input, shape index: {}]
  %s8 = inlined_call_operand.vmem [shape: f32[8,1], index: 8, kind: input, shape index: {}]
  %s9 = inlined_call_operand.vmem [shape: f32[1,384], index: 9, kind: input, shape index: {}]
  %s10 = inlined_call_operand.vmem [shape: f32[2,8,384], index: 10, kind: output, shape index: {}]
  %s11 = sld [smem:[#allocation0]]
  $region73: #{cab_pallas.1} parent=0
    _
  %s13 = ssub.s32 1, %s11
  %s14 = scalar_select 0, %s13, %s11
  loop: start=0, step=1, limit=4
  $region2: #{cab_pallas.1} parent=0 // loop_pre_header
    _
  $region3: #{cab_pallas.1} parent=0 // loop_header
    %s16 = sphi 0, %s20
    %p17 = scmp.ge.s32.totalorder %s16, 4
    %s26 = sphi 0, %s28
    %s29 = sphi 0, %s26
    %s30 = sphi 0, %s29
    %s46 = sphi 0, %s30
    %s50 = sphi 0, %s50
    %s52 = sphi 0, %s50
    %s53 = sphi 0, %s52
    %s67 = sphi 0, %s53
    %s71 = sphi 0, %s71
    %s73 = sphi 0, %s71
    %s74 = sphi 0, %s73
    %s88 = sphi 0, %s74
    %s92 = sphi 0, %s92
    %s94 = sphi 0, %s92
    %s95 = sphi 0, %s94
    %s109 = sphi 0, %s95
    %s113 = sphi 0, %s113
    %s115 = sphi 0, %s113
    %s116 = sphi 0, %s115
    %s130 = sphi 0, %s116
    %s134 = sphi 0, %s134
    %s136 = sphi 0, %s134
    %s137 = sphi 0, %s136
    %s151 = sphi 0, %s137
    %s155 = sphi 0, %s155
    %s157 = sphi 0, %s155
    %s158 = sphi 0, %s157
    %s172 = sphi 0, %s158
    %s176 = sphi 0, %s176
    %s178 = sphi 0, %s176
    %s179 = sphi 0, %s178
    %s193 = sphi 0, %s179
    %s197 = sphi 0, %s197
    %s199 = sphi 0, %s197
    %s200 = sphi 0, %s199
    %s214 = sphi 0, %s200
    %s218 = sphi 0, %s218
    %s220 = sphi 0, %s218
    %s221 = sphi 0, %s220
    %s235 = sphi 0, %s221
    %s241 = sphi 0, %s243
    %s244 = sphi 0, %s241
    %s245 = sphi 0, %s244
    %s261 = sphi 0, %s245
  $region4: #{cab_pallas.1} parent=0 // loop_header_branch
    %19 = sbr.rel (%p17) target = $region8
  $region5: #{cab_pallas.1} parent=0 // loop_body
    %s21 = ssub.s32 %s16, 1
    %s22 = ssub.s32 %s16, 2
    %s23 = sadd.s32 %s16, 1
    %s24 = ssub.s32 %s16, %s23
    %p25 = scmp.eq.s32.totalorder %s24, 0
    %s27 = sadd.s32 %s26, 1
    %s28 = scalar_select %p25, %s26, %s27
    %p31 = pneg %p25
    %p32 = scmp.eq.s32.totalorder %s16, 1
    %p33 = por %p31, %p32
    %p34 = scmp.ne.s32.totalorder %s26, %s29
    %p35 = scmp.eq.s32.totalorder %s16, 0
    %p36 = por %p34, %p35
    %p37 = scmp.ne.s32.totalorder %s26, %s29
    %p38 = scmp.eq.s32.totalorder %s21, 1
    %p39 = por %p37, %p38
    %p40 = scmp.ne.s32.totalorder %s29, %s30
    %p41 = scmp.eq.s32.totalorder %s21, 0
    %p42 = por %p40, %p41
    %p43 = scmp.ne.s32.totalorder %s29, %s30
    %p44 = scmp.eq.s32.totalorder %s22, 1
    %p45 = por %p43, %p44
    %p47 = scmp.ne.s32.totalorder %s30, %s46
    %p48 = scmp.eq.s32.totalorder %s22, 0
    %p49 = por %p47, %p48
    %s51 = sadd.s32 %s50, 1
    %p54 = scmp.eq.s32.totalorder %s16, 1
    %p55 = scmp.ne.s32.totalorder %s50, %s52
    %p56 = scmp.eq.s32.totalorder %s16, 0
    %p57 = por %p55, %p56
    %p58 = scmp.ne.s32.totalorder %s50, %s52
    %p59 = scmp.eq.s32.totalorder %s21, 1
    %p60 = por %p58, %p59
    %p61 = scmp.ne.s32.totalorder %s52, %s53
    %p62 = scmp.eq.s32.totalorder %s21, 0
    %p63 = por %p61, %p62
    %p64 = scmp.ne.s32.totalorder %s52, %s53
    %p65 = scmp.eq.s32.totalorder %s22, 1
    %p66 = por %p64, %p65
    %p68 = scmp.ne.s32.totalorder %s53, %s67
    %p69 = scmp.eq.s32.totalorder %s22, 0
    %p70 = por %p68, %p69
    %s72 = sadd.s32 %s71, 1
    %p75 = scmp.eq.s32.totalorder %s16, 1
    %p76 = scmp.ne.s32.totalorder %s71, %s73
    %p77 = scmp.eq.s32.totalorder %s16, 0
    %p78 = por %p76, %p77
    %p79 = scmp.ne.s32.totalorder %s71, %s73
    %p80 = scmp.eq.s32.totalorder %s21, 1
    %p81 = por %p79, %p80
    %p82 = scmp.ne.s32.totalorder %s73, %s74
    %p83 = scmp.eq.s32.totalorder %s21, 0
    %p84 = por %p82, %p83
    %p85 = scmp.ne.s32.totalorder %s73, %s74
    %p86 = scmp.eq.s32.totalorder %s22, 1
    %p87 = por %p85, %p86
    %p89 = scmp.ne.s32.totalorder %s74, %s88
    %p90 = scmp.eq.s32.totalorder %s22, 0
    %p91 = por %p89, %p90
    %s93 = sadd.s32 %s92, 1
    %p96 = scmp.eq.s32.totalorder %s16, 1
    %p97 = scmp.ne.s32.totalorder %s92, %s94
    %p98 = scmp.eq.s32.totalorder %s16, 0
    %p99 = por %p97, %p98
    %p100 = scmp.ne.s32.totalorder %s92, %s94
    %p101 = scmp.eq.s32.totalorder %s21, 1
    %p102 = por %p100, %p101
    %p103 = scmp.ne.s32.totalorder %s94, %s95
    %p104 = scmp.eq.s32.totalorder %s21, 0
    %p105 = por %p103, %p104
    %p106 = scmp.ne.s32.totalorder %s94, %s95
    %p107 = scmp.eq.s32.totalorder %s22, 1
    %p108 = por %p106, %p107
    %p110 = scmp.ne.s32.totalorder %s95, %s109
    %p111 = scmp.eq.s32.totalorder %s22, 0
    %p112 = por %p110, %p111
    %s114 = sadd.s32 %s113, 1
    %p117 = scmp.eq.s32.totalorder %s16, 1
    %p118 = scmp.ne.s32.totalorder %s113, %s115
    %p119 = scmp.eq.s32.totalorder %s16, 0
    %p120 = por %p118, %p119
    %p121 = scmp.ne.s32.totalorder %s113, %s115
    %p122 = scmp.eq.s32.totalorder %s21, 1
    %p123 = por %p121, %p122
    %p124 = scmp.ne.s32.totalorder %s115, %s116
    %p125 = scmp.eq.s32.totalorder %s21, 0
    %p126 = por %p124, %p125
    %p127 = scmp.ne.s32.totalorder %s115, %s116
    %p128 = scmp.eq.s32.totalorder %s22, 1
    %p129 = por %p127, %p128
    %p131 = scmp.ne.s32.totalorder %s116, %s130
    %p132 = scmp.eq.s32.totalorder %s22, 0
    %p133 = por %p131, %p132
    %s135 = sadd.s32 %s134, 1
    %p138 = scmp.eq.s32.totalorder %s16, 1
    %p139 = scmp.ne.s32.totalorder %s134, %s136
    %p140 = scmp.eq.s32.totalorder %s16, 0
    %p141 = por %p139, %p140
    %p142 = scmp.ne.s32.totalorder %s134, %s136
    %p143 = scmp.eq.s32.totalorder %s21, 1
    %p144 = por %p142, %p143
    %p145 = scmp.ne.s32.totalorder %s136, %s137
    %p146 = scmp.eq.s32.totalorder %s21, 0
    %p147 = por %p145, %p146
    %p148 = scmp.ne.s32.totalorder %s136, %s137
    %p149 = scmp.eq.s32.totalorder %s22, 1
    %p150 = por %p148, %p149
    %p152 = scmp.ne.s32.totalorder %s137, %s151
    %p153 = scmp.eq.s32.totalorder %s22, 0
    %p154 = por %p152, %p153
    %s156 = sadd.s32 %s155, 1
    %p159 = scmp.eq.s32.totalorder %s16, 1
    %p160 = scmp.ne.s32.totalorder %s155, %s157
    %p161 = scmp.eq.s32.totalorder %s16, 0
    %p162 = por %p160, %p161
    %p163 = scmp.ne.s32.totalorder %s155, %s157
    %p164 = scmp.eq.s32.totalorder %s21, 1
    %p165 = por %p163, %p164
    %p166 = scmp.ne.s32.totalorder %s157, %s158
    %p167 = scmp.eq.s32.totalorder %s21, 0
    %p168 = por %p166, %p167
    %p169 = scmp.ne.s32.totalorder %s157, %s158
    %p170 = scmp.eq.s32.totalorder %s22, 1
    %p171 = por %p169, %p170
    %p173 = scmp.ne.s32.totalorder %s158, %s172
    %p174 = scmp.eq.s32.totalorder %s22, 0
    %p175 = por %p173, %p174
    %s177 = sadd.s32 %s176, 1
    %p180 = scmp.eq.s32.totalorder %s16, 1
    %p181 = scmp.ne.s32.totalorder %s176, %s178
    %p182 = scmp.eq.s32.totalorder %s16, 0
    %p183 = por %p181, %p182
    %p184 = scmp.ne.s32.totalorder %s176, %s178
    %p185 = scmp.eq.s32.totalorder %s21, 1
    %p186 = por %p184, %p185
    %p187 = scmp.ne.s32.totalorder %s178, %s179
    %p188 = scmp.eq.s32.totalorder %s21, 0
    %p189 = por %p187, %p188
    %p190 = scmp.ne.s32.totalorder %s178, %s179
    %p191 = scmp.eq.s32.totalorder %s22, 1
    %p192 = por %p190, %p191
    %p194 = scmp.ne.s32.totalorder %s179, %s193
    %p195 = scmp.eq.s32.totalorder %s22, 0
    %p196 = por %p194, %p195
    %s198 = sadd.s32 %s197, 1
    %p201 = scmp.eq.s32.totalorder %s16, 1
    %p202 = scmp.ne.s32.totalorder %s197, %s199
    %p203 = scmp.eq.s32.totalorder %s16, 0
    %p204 = por %p202, %p203
    %p205 = scmp.ne.s32.totalorder %s197, %s199
    %p206 = scmp.eq.s32.totalorder %s21, 1
    %p207 = por %p205, %p206
    %p208 = scmp.ne.s32.totalorder %s199, %s200
    %p209 = scmp.eq.s32.totalorder %s21, 0
    %p210 = por %p208, %p209
    %p211 = scmp.ne.s32.totalorder %s199, %s200
    %p212 = scmp.eq.s32.totalorder %s22, 1
    %p213 = por %p211, %p212
    %p215 = scmp.ne.s32.totalorder %s200, %s214
    %p216 = scmp.eq.s32.totalorder %s22, 0
    %p217 = por %p215, %p216
    %s219 = sadd.s32 %s218, 1
    %p222 = scmp.eq.s32.totalorder %s16, 1
    %p223 = scmp.ne.s32.totalorder %s218, %s220
    %p224 = scmp.eq.s32.totalorder %s16, 0
    %p225 = por %p223, %p224
    %p226 = scmp.ne.s32.totalorder %s218, %s220
    %p227 = scmp.eq.s32.totalorder %s21, 1
    %p228 = por %p226, %p227
    %p229 = scmp.ne.s32.totalorder %s220, %s221
    %p230 = scmp.eq.s32.totalorder %s21, 0
    %p231 = por %p229, %p230
    %p232 = scmp.ne.s32.totalorder %s220, %s221
    %p233 = scmp.eq.s32.totalorder %s22, 1
    %p234 = por %p232, %p233
    %p236 = scmp.ne.s32.totalorder %s221, %s235
    %p237 = scmp.eq.s32.totalorder %s22, 0
    %p238 = por %p236, %p237
    %s239 = ssub.s32 %s16, %s23
    %p240 = scmp.eq.s32.totalorder %s239, 0
    %s242 = sadd.s32 %s241, 1
    %s243 = scalar_select %p240, %s241, %s242
    %p246 = pneg %p240
    %p247 = scmp.eq.s32.totalorder %s16, 1
    %p248 = por %p246, %p247
    %p249 = scmp.ne.s32.totalorder %s241, %s244
    %p250 = scmp.eq.s32.totalorder %s16, 0
    %p251 = por %p249, %p250
    %p252 = scmp.ne.s32.totalorder %s241, %s244
    %p253 = scmp.eq.s32.totalorder %s21, 1
    %p254 = por %p252, %p253
    %p255 = scmp.ne.s32.totalorder %s244, %s245
    %p256 = scmp.eq.s32.totalorder %s21, 0
    %p257 = por %p255, %p256
    %p258 = scmp.ne.s32.totalorder %s244, %s245
    %p259 = scmp.eq.s32.totalorder %s22, 1
    %p260 = por %p258, %p259
    %p262 = scmp.ne.s32.totalorder %s245, %s261
    %p263 = scmp.eq.s32.totalorder %s22, 0
    %p264 = por %p262, %p263
    %p265 = scmp.le.s32.totalorder 1, %s16
    %p266 = scmp.lt.s32.totalorder %s16, 3
    %p267 = pnand %p265, %p266
    %p268 = pneg %p267
    // Predicated region
    $region9: #{cab_pallas.1} parent=5 // pred_check
      _
    $region10: #{cab_pallas.1} parent=5 // pred_check_branch
      %270 = sbr.rel (%p267) target = $region12
    $region11: #{cab_pallas.1} parent=5 // pred_region
      %s271 = ssub.s32 %s16, 1
      // Predicated region
      $region13: #{cab_pallas.1} parent=11 // pred_check
        %p272 = pneg %p63
      $region14: #{cab_pallas.1} parent=11 // pred_check_branch
        %274 = sbr.rel (%p272) target = $region16
      $region15: #{cab_pallas.1} parent=11 // pred_region
        _
      $region16: #{cab_pallas.1} parent=11 // pred_fallthru
        _
      // Predicated region
      $region17: #{cab_pallas.1} parent=11 // pred_check
        %p275 = pneg %p84
      $region18: #{cab_pallas.1} parent=11 // pred_check_branch
        %277 = sbr.rel (%p275) target = $region20
      $region19: #{cab_pallas.1} parent=11 // pred_region
        _
      $region20: #{cab_pallas.1} parent=11 // pred_fallthru
        _
      // Predicated region
      $region21: #{cab_pallas.1} parent=11 // pred_check
        %p278 = pneg %p105
      $region22: #{cab_pallas.1} parent=11 // pred_check_branch
        %280 = sbr.rel (%p278) target = $region24
      $region23: #{cab_pallas.1} parent=11 // pred_region
        _
      $region24: #{cab_pallas.1} parent=11 // pred_fallthru
        _
      // Predicated region
      $region25: #{cab_pallas.1} parent=11 // pred_check
        %p281 = pneg %p126
      $region26: #{cab_pallas.1} parent=11 // pred_check_branch
        %283 = sbr.rel (%p281) target = $region28
      $region27: #{cab_pallas.1} parent=11 // pred_region
        _
      $region28: #{cab_pallas.1} parent=11 // pred_fallthru
        _
      // Predicated region
      $region29: #{cab_pallas.1} parent=11 // pred_check
        %p284 = pneg %p147
      $region30: #{cab_pallas.1} parent=11 // pred_check_branch
        %286 = sbr.rel (%p284) target = $region32
      $region31: #{cab_pallas.1} parent=11 // pred_region
        _
      $region32: #{cab_pallas.1} parent=11 // pred_fallthru
        _
      // Predicated region
      $region33: #{cab_pallas.1} parent=11 // pred_check
        %p287 = pneg %p168
      $region34: #{cab_pallas.1} parent=11 // pred_check_branch
        %289 = sbr.rel (%p287) target = $region36
      $region35: #{cab_pallas.1} parent=11 // pred_region
        _
      $region36: #{cab_pallas.1} parent=11 // pred_fallthru
        _
      // Predicated region
      $region37: #{cab_pallas.1} parent=11 // pred_check
        %p290 = pneg %p189
      $region38: #{cab_pallas.1} parent=11 // pred_check_branch
        %292 = sbr.rel (%p290) target = $region40
      $region39: #{cab_pallas.1} parent=11 // pred_region
        _
      $region40: #{cab_pallas.1} parent=11 // pred_fallthru
        _
      // Predicated region
      $region41: #{cab_pallas.1} parent=11 // pred_check
        %p293 = pneg %p210
      $region42: #{cab_pallas.1} parent=11 // pred_check_branch
        %295 = sbr.rel (%p293) target = $region44
      $region43: #{cab_pallas.1} parent=11 // pred_region
        _
      $region44: #{cab_pallas.1} parent=11 // pred_fallthru
        _
      // Predicated region
      $region45: #{cab_pallas.1} parent=11 // pred_check
        %p296 = pneg %p231
      $region46: #{cab_pallas.1} parent=11 // pred_check_branch
        %298 = sbr.rel (%p296) target = $region48
      $region47: #{cab_pallas.1} parent=11 // pred_region
        _
      $region48: #{cab_pallas.1} parent=11 // pred_fallthru
        _
    $region12: #{cab_pallas.1} parent=5 // pred_fallthru
      _
    %p299 = scmp.lt.s32.totalorder %s16, 2
    // Predicated region
    $region49: #{cab_pallas.1} parent=5 // pred_check
      %p300 = pneg %p299
    $region50: #{cab_pallas.1} parent=5 // pred_check_branch
      %302 = sbr.rel (%p300) target = $region52
    $region51: #{cab_pallas.1} parent=5 // pred_region
      // Predicated region
      $region53: #{cab_pallas.1} parent=51 // pred_check
        %p303 = pneg %p36
      $region54: #{cab_pallas.1} parent=51 // pred_check_branch
        %305 = sbr.rel (%p303) target = $region56
      $region55: #{cab_pallas.1} parent=51 // pred_region
        %p306 = scmp.lt.s32.totalorder %s16, 1
        %s307 = scalar_select %p306, %s16, 1
        %s308 = smul.addr %s307, 5
        %s309 = smul.addr %s308, 8
        %s310 = scalar_lea.vmem %s0, %s309
      $region56: #{cab_pallas.1} parent=51 // pred_fallthru
        _
    $region52: #{cab_pallas.1} parent=5 // pred_fallthru
      _
    %p311 = scmp.le.s32.totalorder 1, %s16
    %p312 = scmp.lt.s32.totalorder %s16, 3
    %p313 = pnand %p311, %p312
    %p314 = pneg %p313
    // Predicated region
    $region57: #{cab_pallas.1} parent=5 // pred_check
      _
    $region58: #{cab_pallas.1} parent=5 // pred_check_branch
      %316 = sbr.rel (%p313) target = $region60
    $region59: #{cab_pallas.1} parent=5 // pred_region
      %s317 = ssub.s32 %s16, 1
      %p318 = scmp.lt.s32.totalorder %s21, 1
      %s319 = scalar_select %p318, %s21, 1
      %s320 = smul.addr %s319, 5
      %s321 = smul.addr %s320, 8
      %s322 = scalar_lea.vmem %s0, %s321
      %p323 = pneg %p42
      %p324 = pneg %p39
      %p325 = pneg %p63
      %p326 = pneg %p60
      %p327 = pneg %p84
      %p328 = pneg %p81
      %p329 = pneg %p105
      %p330 = pneg %p102
      %p331 = pneg %p126
      %p332 = pneg %p123
      %p333 = pneg %p147
      %p334 = pneg %p144
      %p335 = pneg %p168
      %p336 = pneg %p165
      %p337 = pneg %p189
      %p338 = pneg %p186
      %p339 = pneg %p210
      %p340 = pneg %p207
      %p341 = pneg %p231
      %p342 = pneg %p228
      %p343 = pneg %p257
      %p344 = pneg %p254
      %p345 = scmp.lt.s32.totalorder %s21, 1
      %s346 = scalar_select %p345, %s21, 1
      %s347 = smul.addr %s346, 3
      %s348 = smul.addr %s347, 8
      %s349 = scalar_lea.vmem %s10, %s348
      %p350 = scmp.lt.s32.totalorder %s21, 1
      %s351 = scalar_select %p350, %s21, 1
      %s352 = smul.addr %s351, 5
      %s353 = smul.addr %s352, 8
      %s354 = scalar_lea.vmem %s0, %s353
      %p355 = scmp.lt.s32.totalorder %s21, 1
      %s356 = scalar_select %p355, %s21, 1
      %s357 = smul.addr %s356, 3
      %s358 = smul.addr %s357, 8
      %s359 = scalar_lea.vmem %s10, %s358
      %v360 = vld [vmem:[%s9] sm:$0x7]
      %v361 = vld [vmem:[%s354] sm:$0xff]
      %v362 = vld [vmem:[%s354 + $0x8] sm:$0xff]
      %v363 = vld [vmem:[%s354 + $0x10] sm:$0xff]
      %v364 = vld [vmem:[%s354 + $0x18] sm:$0xff]
      %v365 = vld [vmem:[%s354 + $0x20] sm:$0xff]
      %370 = vrot.lane.b32.xlu0 %v361, 127
      %v371 = vpop.permute.xlu0 %370
      %372 = vrot.lane.b32.xlu0 %v362, 127
      %v373 = vpop.permute.xlu0 %372
      %374 = vrot.lane.b32.xlu0 %v363, 127
      %v375 = vpop.permute.xlu0 %374
      %376 = vrot.lane.b32.xlu0 %v364, 127
      %v377 = vpop.permute.xlu0 %376
      %vm378 = vcmask 1039360
      %v379 = vsel %vm378, %v371, %v373
      %v380 = vsel %vm378, %v373, %v375
      %v381 = vsel %vm378, %v375, %v377
      %382 = vrot.lane.b32.xlu0 %v361, 126
      %v383 = vpop.permute.xlu0 %382
      %384 = vrot.lane.b32.xlu0 %v362, 126
      %v385 = vpop.permute.xlu0 %384
      %386 = vrot.lane.b32.xlu0 %v363, 126
      %v387 = vpop.permute.xlu0 %386
      %388 = vrot.lane.b32.xlu0 %v364, 126
      %v389 = vpop.permute.xlu0 %388
      %vm390 = vcmask 1031168
      %v391 = vsel %vm390, %v383, %v385
      %v392 = vsel %vm390, %v385, %v387
      %v393 = vsel %vm390, %v387, %v389
      %394 = vrot.lane.b32.xlu0 %v361, 110
      %v395 = vpop.permute.xlu0 %394
      %396 = vrot.lane.b32.xlu0 %v362, 110
      %v397 = vpop.permute.xlu0 %396
      %398 = vrot.lane.b32.xlu0 %v363, 110
      %v399 = vpop.permute.xlu0 %398
      %400 = vrot.lane.b32.xlu0 %v364, 110
      %v401 = vpop.permute.xlu0 %400
      %vm402 = vcmask 900096
      %v403 = vsel %vm402, %v395, %v397
      %v404 = vsel %vm402, %v397, %v399
      %v405 = vsel %vm402, %v399, %v401
      %406 = vrot.lane.b32.xlu0 %v362, 109
      %v407 = vpop.permute.xlu0 %406
      %408 = vrot.lane.b32.xlu0 %v363, 109
      %v409 = vpop.permute.xlu0 %408
      %410 = vrot.lane.b32.xlu0 %v364, 109
      %v411 = vpop.permute.xlu0 %410
      %vm412 = vcmask 891904
      %v413 = vsel %vm412, %v407, %v409
      %v414 = vsel %vm412, %v409, %v411
      %416 = vrot.lane.b32.xlu0 %v362, 108
      %v417 = vpop.permute.xlu0 %416
      %418 = vrot.lane.b32.xlu0 %v363, 108
      %v419 = vpop.permute.xlu0 %418
      %420 = vrot.lane.b32.xlu0 %v364, 108
      %v421 = vpop.permute.xlu0 %420
      %422 = vrot.lane.b32.xlu0 %v365, 108
      %v423 = vpop.permute.xlu0 %422
      %vm424 = vcmask 883712
      %v425 = vsel %vm424, %v417, %v419
      %v426 = vsel %vm424, %v419, %v421
      %v427 = vsel %vm424, %v421, %v423
      %428 = vrot.lane.b32.xlu0 %v362, 92
      %v429 = vpop.permute.xlu0 %428
      %430 = vrot.lane.b32.xlu0 %v363, 92
      %v431 = vpop.permute.xlu0 %430
      %432 = vrot.lane.b32.xlu0 %v364, 92
      %v433 = vpop.permute.xlu0 %432
      %434 = vrot.lane.b32.xlu0 %v365, 92
      %v435 = vpop.permute.xlu0 %434
      %vm436 = vcmask 752640
      %v437 = vsel %vm436, %v429, %v431
      %v438 = vsel %vm436, %v431, %v433
      %v439 = vsel %vm436, %v433, %v435
      %440 = vrot.lane.b32.xlu0 %v362, 91
      %v441 = vpop.permute.xlu0 %440
      %442 = vrot.lane.b32.xlu0 %v363, 91
      %v443 = vpop.permute.xlu0 %442
      %444 = vrot.lane.b32.xlu0 %v364, 91
      %v445 = vpop.permute.xlu0 %444
      %446 = vrot.lane.b32.xlu0 %v365, 91
      %v447 = vpop.permute.xlu0 %446
      %vm448 = vcmask 744448
      %v449 = vsel %vm448, %v441, %v443
      %v450 = vsel %vm448, %v443, %v445
      %v451 = vsel %vm448, %v445, %v447
      %452 = vrot.lane.b32.xlu0 %v362, 90
      %v453 = vpop.permute.xlu0 %452
      %454 = vrot.lane.b32.xlu0 %v363, 90
      %v455 = vpop.permute.xlu0 %454
      %456 = vrot.lane.b32.xlu0 %v364, 90
      %v457 = vpop.permute.xlu0 %456
      %458 = vrot.lane.b32.xlu0 %v365, 90
      %v459 = vpop.permute.xlu0 %458
      %vm460 = vcmask 736256
      %v461 = vsel %vm460, %v453, %v455
      %v462 = vsel %vm460, %v455, %v457
      %v463 = vsel %vm460, %v457, %v459
      %v464 = vld [vmem:[%s1] sm:$0xff]
      %v465 = vld [vmem:[%s2] sm:$0xff]
      %467 = vset.pattern.permute.xlu0 0
      %468 = vperm.xlu0 %467, %v465
      %v469 = vpop.permute.xlu0 %468
      %471 = vrot.lane.b32.xlu0 %v361, 19
      %v472 = vpop.permute.xlu0 %471
      %473 = vrot.lane.b32.xlu0 %v362, 19
      %v474 = vpop.permute.xlu0 %473
      %475 = vrot.lane.b32.xlu0 %v363, 19
      %v476 = vpop.permute.xlu0 %475
      %477 = vrot.lane.b32.xlu0 %v364, 19
      %v478 = vpop.permute.xlu0 %477
      %479 = vrot.lane.b32.xlu0 %v379, 19
      %v480 = vpop.permute.xlu0 %479
      %481 = vrot.lane.b32.xlu0 %v380, 19
      %v482 = vpop.permute.xlu0 %481
      %483 = vrot.lane.b32.xlu0 %v381, 19
      %v484 = vpop.permute.xlu0 %483
      %485 = vrot.lane.b32.xlu0 %v377, 19
      %v486 = vpop.permute.xlu0 %485
      %487 = vrot.lane.b32.xlu0 %v391, 19
      %v488 = vpop.permute.xlu0 %487
      %489 = vrot.lane.b32.xlu0 %v392, 19
      %v490 = vpop.permute.xlu0 %489
      %491 = vrot.lane.b32.xlu0 %v393, 19
      %v492 = vpop.permute.xlu0 %491
      %493 = vrot.lane.b32.xlu0 %v389, 19
      %v494 = vpop.permute.xlu0 %493
      %495 = vrot.lane.b32.xlu0 %v403, 19
      %v496 = vpop.permute.xlu0 %495
      %497 = vrot.lane.b32.xlu0 %v404, 19
      %v498 = vpop.permute.xlu0 %497
      %499 = vrot.lane.b32.xlu0 %v405, 19
      %v500 = vpop.permute.xlu0 %499
      %501 = vrot.lane.b32.xlu0 %v401, 19
      %v502 = vpop.permute.xlu0 %501
      %503 = vrot.lane.b32.xlu0 %v407, 19
      %v504 = vpop.permute.xlu0 %503
      %505 = vrot.lane.b32.xlu0 %v413, 19
      %v506 = vpop.permute.xlu0 %505
      %507 = vrot.lane.b32.xlu0 %v414, 19
      %v508 = vpop.permute.xlu0 %507
      %509 = vrot.lane.b32.xlu0 %v411, 19
      %v510 = vpop.permute.xlu0 %509
      %511 = vrot.lane.b32.xlu0 %v417, 19
      %v512 = vpop.permute.xlu0 %511
      %513 = vrot.lane.b32.xlu0 %v425, 19
      %v514 = vpop.permute.xlu0 %513
      %515 = vrot.lane.b32.xlu0 %v426, 19
      %v516 = vpop.permute.xlu0 %515
      %517 = vrot.lane.b32.xlu0 %v427, 19
      %v518 = vpop.permute.xlu0 %517
      %519 = vrot.lane.b32.xlu0 %v429, 19
      %v520 = vpop.permute.xlu0 %519
      %521 = vrot.lane.b32.xlu0 %v437, 19
      %v522 = vpop.permute.xlu0 %521
      %523 = vrot.lane.b32.xlu0 %v438, 19
      %v524 = vpop.permute.xlu0 %523
      %525 = vrot.lane.b32.xlu0 %v439, 19
      %v526 = vpop.permute.xlu0 %525
      %527 = vrot.lane.b32.xlu0 %v441, 19
      %v528 = vpop.permute.xlu0 %527
      %529 = vrot.lane.b32.xlu0 %v449, 19
      %v530 = vpop.permute.xlu0 %529
      %531 = vrot.lane.b32.xlu0 %v450, 19
      %v532 = vpop.permute.xlu0 %531
      %533 = vrot.lane.b32.xlu0 %v451, 19
      %v534 = vpop.permute.xlu0 %533
      %535 = vrot.lane.b32.xlu0 %v453, 19
      %v536 = vpop.permute.xlu0 %535
      %537 = vrot.lane.b32.xlu0 %v461, 19
      %v538 = vpop.permute.xlu0 %537
      %539 = vrot.lane.b32.xlu0 %v462, 19
      %v540 = vpop.permute.xlu0 %539
      %541 = vrot.lane.b32.xlu0 %v463, 19
      %v542 = vpop.permute.xlu0 %541
      %vm543 = vcmask 154624
      %v544 = vsel %vm543, %v472, %v474
      %v545 = vsel %vm543, %v474, %v476
      %v546 = vsel %vm543, %v476, %v478
      %v547 = vsel %vm543, %v480, %v482
      %v548 = vsel %vm543, %v482, %v484
      %v549 = vsel %vm543, %v484, %v486
      %v550 = vsel %vm543, %v488, %v490
      %v551 = vsel %vm543, %v490, %v492
      %v552 = vsel %vm543, %v492, %v494
      %v553 = vsel %vm543, %v496, %v498
      %v554 = vsel %vm543, %v498, %v500
      %v555 = vsel %vm543, %v500, %v502
      %v556 = vsel %vm543, %v504, %v506
      %v557 = vsel %vm543, %v506, %v508
      %v558 = vsel %vm543, %v508, %v510
      %v559 = vsel %vm543, %v512, %v514
      %v560 = vsel %vm543, %v514, %v516
      %v561 = vsel %vm543, %v516, %v518
      %v562 = vsel %vm543, %v520, %v522
      %v563 = vsel %vm543, %v522, %v524
      %v564 = vsel %vm543, %v524, %v526
      %v565 = vsel %vm543, %v528, %v530
      %v566 = vsel %vm543, %v530, %v532
      %v567 = vsel %vm543, %v532, %v534
      %v568 = vsel %vm543, %v536, %v538
      %v569 = vsel %vm543, %v538, %v540
      %v570 = vsel %vm543, %v540, %v542
      %vm598 = vcmask 588800
      %v600 = vsel %vm598, %v464, 0
      %602 = vmatprep.subr.mxu0 %v545
      %603 = vmatpush1.msra.mxu0 %v544
      %604 = vmatprep.subr.mxu0 %v548
      %605 = vmatpush1.msra.mxu0 %v547
      %606 = vmatprep.subr.mxu0 %v551
      %607 = vmatpush1.msra.mxu0 %v550
      %608 = vmatprep.subr.mxu0 %v554
      %609 = vmatpush1.msra.mxu0 %v553
      %610 = vmatprep.subr.mxu0 %v557
      %611 = vmatpush1.msra.mxu0 %v556
      %612 = vmatprep.subr.mxu0 %v560
      %613 = vmatpush1.msra.mxu0 %v559
      %614 = vmatprep.subr.mxu0 %v563
      %615 = vmatpush1.msra.mxu0 %v562
      %616 = vmatprep.subr.mxu0 %v566
      %617 = vmatpush1.msra.mxu0 %v565
      %618 = vmatprep.subr.mxu0 %v569
      %619 = vmatpush1.msra.mxu0 %v568
      %620 = vmatprep.subr.mxu0 0.0
      %621 = vmatpush1.msra.mxu0 0.0
      %622 = vmatprep.subr.mxu0 0.0
      %623 = vmatpush1.msra.mxu0 0.0
      %624 = vmatprep.subr.mxu0 0.0
      %625 = vmatpush1.msra.mxu0 0.0
      %626 = vmatprep.subr.mxu0 0.0
      %627 = vmatpush1.msra.mxu0 0.0
      %628 = vmatprep.subr.mxu0 0.0
      %629 = vmatpush1.msra.mxu0 0.0
      %630 = vmatprep.subr.mxu0 0.0
      %631 = vmatpush1.msra.mxu0 0.0
      %632 = vmatprep.subr.mxu0 0.0
      %633 = vmatpush1.msra.mxu0 0.0
      %634 = vmatprep.subr.mxu0 0.0
      %635 = vmatpush1.msra.mxu0 0.0
      %636 = vmatprep.subr.mxu0 0.0
      %637 = vmatpush1.msra.mxu0 0.0
      %638 = vmatprep.subr.mxu0 0.0
      %639 = vmatpush1.msra.mxu0 0.0
      %640 = vmatprep.subr.mxu0 0.0
      %641 = vmatpush1.msra.mxu0 0.0
      %642 = vmatprep.subr.mxu0 0.0
      %643 = vmatpush1.msra.mxu0 0.0
      %644 = vmatprep.subr.mxu0 0.0
      %645 = vmatpush1.msra.mxu0 0.0
      %646 = vmatprep.subr.mxu0 0.0
      %647 = vmatpush1.msra.mxu0 0.0
      %648 = vmatprep.subr.mxu0 0.0
      %649 = vmatpush1.msra.mxu0 0.0
      %650 = vmatprep.subr.mxu0 0.0
      %651 = vmatpush1.msra.mxu0 0.0
      %652 = vmatprep.subr.mxu0 0.0
      %653 = vmatpush1.msra.mxu0 0.0
      %654 = vmatprep.subr.mxu0 0.0
      %655 = vmatpush1.msra.mxu0 0.0
      %656 = vmatprep.subr.mxu0 0.0
      %657 = vmatpush1.msra.mxu0 0.0
      %658 = vmatprep.subr.mxu0 0.0
      %659 = vmatpush1.msra.mxu0 0.0
      %660 = vmatprep.subr.mxu0 0.0
      %661 = vmatpush1.msra.mxu0 0.0
      %662 = vmatprep.subr.mxu0 0.0
      %663 = vmatpush1.msra.mxu0 0.0
      %664 = vmatprep.subr.mxu0 0.0
      %665 = vmatpush1.msra.mxu0 0.0
      %666 = vmatprep.mubr.f32.mxu0 0.0
      %667 = vmatmul.mubr.f32.gmra.mrb[0].mxu0 %v600
      %v668 = vpop.f32.mrb[0].mxu0
      %v669 = vadd.f32 %v469, %v668
      %v670 = vpop.f32.mrb[0].mxu0
      %v671 = vadd.f32 %v469, %v670
      %672 = vdwg.mxu0
      %673 = vmatprep.subr.mxu0 0.0
      %674 = vmatpush1.msra.mxu0 %v546
      %675 = vmatprep.subr.mxu0 0.0
      %676 = vmatpush1.msra.mxu0 %v549
      %677 = vmatprep.subr.mxu0 0.0
      %678 = vmatpush1.msra.mxu0 %v552
      %679 = vmatprep.subr.mxu0 0.0
      %680 = vmatpush1.msra.mxu0 %v555
      %681 = vmatprep.subr.mxu0 0.0
      %682 = vmatpush1.msra.mxu0 %v558
      %683 = vmatprep.subr.mxu0 0.0
      %684 = vmatpush1.msra.mxu0 %v561
      %685 = vmatprep.subr.mxu0 0.0
      %686 = vmatpush1.msra.mxu0 %v564
      %687 = vmatprep.subr.mxu0 0.0
      %688 = vmatpush1.msra.mxu0 %v567
      %689 = vmatprep.subr.mxu0 0.0
      %690 = vmatpush1.msra.mxu0 %v570
      %691 = vmatprep.subr.mxu0 0.0
      %692 = vmatpush1.msra.mxu0 0.0
      %693 = vmatprep.subr.mxu0 0.0
      %694 = vmatpush1.msra.mxu0 0.0
      %695 = vmatprep.subr.mxu0 0.0
      %696 = vmatpush1.msra.mxu0 0.0
      %697 = vmatprep.subr.mxu0 0.0
      %698 = vmatpush1.msra.mxu0 0.0
      %699 = vmatprep.subr.mxu0 0.0
      %700 = vmatpush1.msra.mxu0 0.0
      %701 = vmatprep.subr.mxu0 0.0
      %702 = vmatpush1.msra.mxu0 0.0
      %703 = vmatprep.subr.mxu0 0.0
      %704 = vmatpush1.msra.mxu0 0.0
      %705 = vmatprep.subr.mxu0 0.0
      %706 = vmatpush1.msra.mxu0 0.0
      %707 = vmatprep.subr.mxu0 0.0
      %708 = vmatpush1.msra.mxu0 0.0
      %709 = vmatprep.subr.mxu0 0.0
      %710 = vmatpush1.msra.mxu0 0.0
      %711 = vmatprep.subr.mxu0 0.0
      %712 = vmatpush1.msra.mxu0 0.0
      %713 = vmatprep.subr.mxu0 0.0
      %714 = vmatpush1.msra.mxu0 0.0
      %715 = vmatprep.subr.mxu0 0.0
      %716 = vmatpush1.msra.mxu0 0.0
      %717 = vmatprep.subr.mxu0 0.0
      %718 = vmatpush1.msra.mxu0 0.0
      %719 = vmatprep.subr.mxu0 0.0
      %720 = vmatpush1.msra.mxu0 0.0
      %721 = vmatprep.subr.mxu0 0.0
      %722 = vmatpush1.msra.mxu0 0.0
      %723 = vmatprep.subr.mxu0 0.0
      %724 = vmatpush1.msra.mxu0 0.0
      %725 = vmatprep.subr.mxu0 0.0
      %726 = vmatpush1.msra.mxu0 0.0
      %727 = vmatprep.subr.mxu0 0.0
      %728 = vmatpush1.msra.mxu0 0.0
      %729 = vmatprep.subr.mxu0 0.0
      %730 = vmatpush1.msra.mxu0 0.0
      %731 = vmatprep.subr.mxu0 0.0
      %732 = vmatpush1.msra.mxu0 0.0
      %733 = vmatprep.subr.mxu0 0.0
      %734 = vmatpush1.msra.mxu0 0.0
      %735 = vmatprep.subr.mxu0 0.0
      %736 = vmatpush1.msra.mxu0 0.0
      %737 = vmatprep.mubr.f32.mxu0 0.0
      %738 = vmatmul.mubr.f32.gmra.mrb[0].mxu0 %v600
      %v739 = vpop.f32.mrb[0].mxu0
      %v740 = vadd.f32 %v469, %v739
      %v741 = vpop.f32.mrb[0].mxu0
      %742 = vdwg.mxu0
      %v743 = vmax.f32 %v669, 0.0
      %v744 = vmax.f32 %v671, 0.0
      %v745 = vmax.f32 %v740, 0.0
      %v747 = vlaneseq
      %v748 = vshrl.u32 %v747, 7
      %v749 = vsub.s32 0, %v748
      %v750 = vrot.slane %v360, %v749
      %v751 = vlaneseq
      %v752 = vshrl.u32 %v751, 7
      %v753 = vsub.s32 1, %v752
      %v754 = vrot.slane %v360, %v753
      %v755 = vlaneseq
      %v756 = vshrl.u32 %v755, 7
      %v757 = vsub.s32 2, %v756
      %v758 = vrot.slane %v360, %v757
      %v762 = vmul.f32 %v743, %v750
      %v763 = vmul.f32 %v744, %v754
      %v764 = vmul.f32 %v745, %v758
      %765 = vst [vmem:[#allocation2] sm:$0xff] 0.0
      %766 = vst [vmem:[#allocation2 + $0x8] sm:$0xff] %v762
      %767 = vst [vmem:[#allocation2 + $0x10] sm:$0xff] %v763
      %768 = vst [vmem:[#allocation2 + $0x18] sm:$0xff] %v764
      %769 = vst [vmem:[#allocation2 + $0x20] sm:$0xff] 0.0
      %v770 = vld [vmem:[#allocation2] sm:$0xff]
      %v771 = vld [vmem:[#allocation2 + $0x8] sm:$0xff]
      %v772 = vld [vmem:[#allocation2 + $0x10] sm:$0xff]
      %v773 = vld [vmem:[#allocation2 + $0x18] sm:$0xff]
      %v774 = vld [vmem:[#allocation2 + $0x20] sm:$0xff]
      %779 = vrot.lane.b32.xlu0 %v770, 127
      %v780 = vpop.permute.xlu0 %779
      %781 = vrot.lane.b32.xlu0 %v771, 127
      %v782 = vpop.permute.xlu0 %781
      %783 = vrot.lane.b32.xlu0 %v772, 127
      %v784 = vpop.permute.xlu0 %783
      %785 = vrot.lane.b32.xlu0 %v773, 127
      %v786 = vpop.permute.xlu0 %785
      %v787 = vsel %vm378, %v780, %v782
      %v788 = vsel %vm378, %v782, %v784
      %v789 = vsel %vm378, %v784, %v786
      %790 = vrot.lane.b32.xlu0 %v770, 126
      %v791 = vpop.permute.xlu0 %790
      %792 = vrot.lane.b32.xlu0 %v771, 126
      %v793 = vpop.permute.xlu0 %792
      %794 = vrot.lane.b32.xlu0 %v772, 126
      %v795 = vpop.permute.xlu0 %794
      %796 = vrot.lane.b32.xlu0 %v773, 126
      %v797 = vpop.permute.xlu0 %796
      %v798 = vsel %vm390, %v791, %v793
      %v799 = vsel %vm390, %v793, %v795
      %v800 = vsel %vm390, %v795, %v797
      %801 = vrot.lane.b32.xlu0 %v770, 110
      %v802 = vpop.permute.xlu0 %801
      %803 = vrot.lane.b32.xlu0 %v771, 110
      %v804 = vpop.permute.xlu0 %803
      %805 = vrot.lane.b32.xlu0 %v772, 110
      %v806 = vpop.permute.xlu0 %805
      %807 = vrot.lane.b32.xlu0 %v773, 110
      %v808 = vpop.permute.xlu0 %807
      %v809 = vsel %vm402, %v802, %v804
      %v810 = vsel %vm402, %v804, %v806
      %v811 = vsel %vm402, %v806, %v808
      %812 = vrot.lane.b32.xlu0 %v771, 109
      %v813 = vpop.permute.xlu0 %812
      %814 = vrot.lane.b32.xlu0 %v772, 109
      %v815 = vpop.permute.xlu0 %814
      %816 = vrot.lane.b32.xlu0 %v773, 109
      %v817 = vpop.permute.xlu0 %816
      %v818 = vsel %vm412, %v813, %v815
      %v819 = vsel %vm412, %v815, %v817
      %821 = vrot.lane.b32.xlu0 %v771, 108
      %v822 = vpop.permute.xlu0 %821
      %823 = vrot.lane.b32.xlu0 %v772, 108
      %v824 = vpop.permute.xlu0 %823
      %825 = vrot.lane.b32.xlu0 %v773, 108
      %v826 = vpop.permute.xlu0 %825
      %827 = vrot.lane.b32.xlu0 %v774, 108
      %v828 = vpop.permute.xlu0 %827
      %v829 = vsel %vm424, %v822, %v824
      %v830 = vsel %vm424, %v824, %v826
      %v831 = vsel %vm424, %v826, %v828
      %832 = vrot.lane.b32.xlu0 %v771, 92
      %v833 = vpop.permute.xlu0 %832
      %834 = vrot.lane.b32.xlu0 %v772, 92
      %v835 = vpop.permute.xlu0 %834
      %836 = vrot.lane.b32.xlu0 %v773, 92
      %v837 = vpop.permute.xlu0 %836
      %838 = vrot.lane.b32.xlu0 %v774, 92
      %v839 = vpop.permute.xlu0 %838
      %v840 = vsel %vm436, %v833, %v835
      %v841 = vsel %vm436, %v835, %v837
      %v842 = vsel %vm436, %v837, %v839
      %843 = vrot.lane.b32.xlu0 %v771, 91
      %v844 = vpop.permute.xlu0 %843
      %845 = vrot.lane.b32.xlu0 %v772, 91
      %v846 = vpop.permute.xlu0 %845
      %847 = vrot.lane.b32.xlu0 %v773, 91
      %v848 = vpop.permute.xlu0 %847
      %849 = vrot.lane.b32.xlu0 %v774, 91
      %v850 = vpop.permute.xlu0 %849
      %v851 = vsel %vm448, %v844, %v846
      %v852 = vsel %vm448, %v846, %v848
      %v853 = vsel %vm448, %v848, %v850
      %854 = vrot.lane.b32.xlu0 %v771, 90
      %v855 = vpop.permute.xlu0 %854
      %856 = vrot.lane.b32.xlu0 %v772, 90
      %v857 = vpop.permute.xlu0 %856
      %858 = vrot.lane.b32.xlu0 %v773, 90
      %v859 = vpop.permute.xlu0 %858
      %860 = vrot.lane.b32.xlu0 %v774, 90
      %v861 = vpop.permute.xlu0 %860
      %v862 = vsel %vm460, %v855, %v857
      %v863 = vsel %vm460, %v857, %v859
      %v864 = vsel %vm460, %v859, %v861
      %v865 = vld [vmem:[%s3] sm:$0xff]
      %v866 = vld [vmem:[%s4] sm:$0xff]
      %868 = vset.pattern.permute.xlu0 0
      %869 = vperm.xlu0 %868, %v866
      %v870 = vpop.permute.xlu0 %869
      %872 = vrot.lane.b32.xlu0 %v770, 19
      %v873 = vpop.permute.xlu0 %872
      %874 = vrot.lane.b32.xlu0 %v771, 19
      %v875 = vpop.permute.xlu0 %874
      %876 = vrot.lane.b32.xlu0 %v772, 19
      %v877 = vpop.permute.xlu0 %876
      %878 = vrot.lane.b32.xlu0 %v773, 19
      %v879 = vpop.permute.xlu0 %878
      %880 = vrot.lane.b32.xlu0 %v787, 19
      %v881 = vpop.permute.xlu0 %880
      %882 = vrot.lane.b32.xlu0 %v788, 19
      %v883 = vpop.permute.xlu0 %882
      %884 = vrot.lane.b32.xlu0 %v789, 19
      %v885 = vpop.permute.xlu0 %884
      %886 = vrot.lane.b32.xlu0 %v786, 19
      %v887 = vpop.permute.xlu0 %886
      %888 = vrot.lane.b32.xlu0 %v798, 19
      %v889 = vpop.permute.xlu0 %888
      %890 = vrot.lane.b32.xlu0 %v799, 19
      %v891 = vpop.permute.xlu0 %890
      %892 = vrot.lane.b32.xlu0 %v800, 19
      %v893 = vpop.permute.xlu0 %892
      %894 = vrot.lane.b32.xlu0 %v797, 19
      %v895 = vpop.permute.xlu0 %894
      %896 = vrot.lane.b32.xlu0 %v809, 19
      %v897 = vpop.permute.xlu0 %896
      %898 = vrot.lane.b32.xlu0 %v810, 19
      %v899 = vpop.permute.xlu0 %898
      %900 = vrot.lane.b32.xlu0 %v811, 19
      %v901 = vpop.permute.xlu0 %900
      %902 = vrot.lane.b32.xlu0 %v808, 19
      %v903 = vpop.permute.xlu0 %902
      %904 = vrot.lane.b32.xlu0 %v813, 19
      %v905 = vpop.permute.xlu0 %904
      %906 = vrot.lane.b32.xlu0 %v818, 19
      %v907 = vpop.permute.xlu0 %906
      %908 = vrot.lane.b32.xlu0 %v819, 19
      %v909 = vpop.permute.xlu0 %908
      %910 = vrot.lane.b32.xlu0 %v817, 19
      %v911 = vpop.permute.xlu0 %910
      %912 = vrot.lane.b32.xlu0 %v822, 19
      %v913 = vpop.permute.xlu0 %912
      %914 = vrot.lane.b32.xlu0 %v829, 19
      %v915 = vpop.permute.xlu0 %914
      %916 = vrot.lane.b32.xlu0 %v830, 19
      %v917 = vpop.permute.xlu0 %916
      %918 = vrot.lane.b32.xlu0 %v831, 19
      %v919 = vpop.permute.xlu0 %918
      %920 = vrot.lane.b32.xlu0 %v833, 19
      %v921 = vpop.permute.xlu0 %920
      %922 = vrot.lane.b32.xlu0 %v840, 19
      %v923 = vpop.permute.xlu0 %922
      %924 = vrot.lane.b32.xlu0 %v841, 19
      %v925 = vpop.permute.xlu0 %924
      %926 = vrot.lane.b32.xlu0 %v842, 19
      %v927 = vpop.permute.xlu0 %926
      %928 = vrot.lane.b32.xlu0 %v844, 19
      %v929 = vpop.permute.xlu0 %928
      %930 = vrot.lane.b32.xlu0 %v851, 19
      %v931 = vpop.permute.xlu0 %930
      %932 = vrot.lane.b32.xlu0 %v852, 19
      %v933 = vpop.permute.xlu0 %932
      %934 = vrot.lane.b32.xlu0 %v853, 19
      %v935 = vpop.permute.xlu0 %934
      %936 = vrot.lane.b32.xlu0 %v855, 19
      %v937 = vpop.permute.xlu0 %936
      %938 = vrot.lane.b32.xlu0 %v862, 19
      %v939 = vpop.permute.xlu0 %938
      %940 = vrot.lane.b32.xlu0 %v863, 19
      %v941 = vpop.permute.xlu0 %940
      %942 = vrot.lane.b32.xlu0 %v864, 19
      %v943 = vpop.permute.xlu0 %942
      %v944 = vsel %vm543, %v873, %v875
      %v945 = vsel %vm543, %v875, %v877
      %v946 = vsel %vm543, %v877, %v879
      %v947 = vsel %vm543, %v881, %v883
      %v948 = vsel %vm543, %v883, %v885
      %v949 = vsel %vm543, %v885, %v887
      %v950 = vsel %vm543, %v889, %v891
      %v951 = vsel %vm543, %v891, %v893
      %v952 = vsel %vm543, %v893, %v895
      %v953 = vsel %vm543, %v897, %v899
      %v954 = vsel %vm543, %v899, %v901
      %v955 = vsel %vm543, %v901, %v903
      %v956 = vsel %vm543, %v905, %v907
      %v957 = vsel %vm543, %v907, %v909
      %v958 = vsel %vm543, %v909, %v911
      %v959 = vsel %vm543, %v913, %v915
      %v960 = vsel %vm543, %v915, %v917
      %v961 = vsel %vm543, %v917, %v919
      %v962 = vsel %vm543, %v921, %v923
      %v963 = vsel %vm543, %v923, %v925
      %v964 = vsel %vm543, %v925, %v927
      %v965 = vsel %vm543, %v929, %v931
      %v966 = vsel %vm543, %v931, %v933
      %v967 = vsel %vm543, %v933, %v935
      %v968 = vsel %vm543, %v937, %v939
      %v969 = vsel %vm543, %v939, %v941
      %v970 = vsel %vm543, %v941, %v943
      %v999 = vsel %vm598, %v865, 0
      %1001 = vmatprep.subr.mxu0 %v945
      %1002 = vmatpush1.msra.mxu0 %v944
      %1003 = vmatprep.subr.mxu0 %v948
      %1004 = vmatpush1.msra.mxu0 %v947
      %1005 = vmatprep.subr.mxu0 %v951
      %1006 = vmatpush1.msra.mxu0 %v950
      %1007 = vmatprep.subr.mxu0 %v954
      %1008 = vmatpush1.msra.mxu0 %v953
      %1009 = vmatprep.subr.mxu0 %v957
      %1010 = vmatpush1.msra.mxu0 %v956
      %1011 = vmatprep.subr.mxu0 %v960
      %1012 = vmatpush1.msra.mxu0 %v959
      %1013 = vmatprep.subr.mxu0 %v963
      %1014 = vmatpush1.msra.mxu0 %v962
      %1015 = vmatprep.subr.mxu0 %v966
      %1016 = vmatpush1.msra.mxu0 %v965
      %1017 = vmatprep.subr.mxu0 %v969
      %1018 = vmatpush1.msra.mxu0 %v968
      %1019 = vmatprep.subr.mxu0 0.0
      %1020 = vmatpush1.msra.mxu0 0.0
      %1021 = vmatprep.subr.mxu0 0.0
      %1022 = vmatpush1.msra.mxu0 0.0
      %1023 = vmatprep.subr.mxu0 0.0
      %1024 = vmatpush1.msra.mxu0 0.0
      %1025 = vmatprep.subr.mxu0 0.0
      %1026 = vmatpush1.msra.mxu0 0.0
      %1027 = vmatprep.subr.mxu0 0.0
      %1028 = vmatpush1.msra.mxu0 0.0
      %1029 = vmatprep.subr.mxu0 0.0
      %1030 = vmatpush1.msra.mxu0 0.0
      %1031 = vmatprep.subr.mxu0 0.0
      %1032 = vmatpush1.msra.mxu0 0.0
      %1033 = vmatprep.subr.mxu0 0.0
      %1034 = vmatpush1.msra.mxu0 0.0
      %1035 = vmatprep.subr.mxu0 0.0
      %1036 = vmatpush1.msra.mxu0 0.0
      %1037 = vmatprep.subr.mxu0 0.0
      %1038 = vmatpush1.msra.mxu0 0.0
      %1039 = vmatprep.subr.mxu0 0.0
      %1040 = vmatpush1.msra.mxu0 0.0
      %1041 = vmatprep.subr.mxu0 0.0
      %1042 = vmatpush1.msra.mxu0 0.0
      %1043 = vmatprep.subr.mxu0 0.0
      %1044 = vmatpush1.msra.mxu0 0.0
      %1045 = vmatprep.subr.mxu0 0.0
      %1046 = vmatpush1.msra.mxu0 0.0
      %1047 = vmatprep.subr.mxu0 0.0
      %1048 = vmatpush1.msra.mxu0 0.0
      %1049 = vmatprep.subr.mxu0 0.0
      %1050 = vmatpush1.msra.mxu0 0.0
      %1051 = vmatprep.subr.mxu0 0.0
      %1052 = vmatpush1.msra.mxu0 0.0
      %1053 = vmatprep.subr.mxu0 0.0
      %1054 = vmatpush1.msra.mxu0 0.0
      %1055 = vmatprep.subr.mxu0 0.0
      %1056 = vmatpush1.msra.mxu0 0.0
      %1057 = vmatprep.subr.mxu0 0.0
      %1058 = vmatpush1.msra.mxu0 0.0
      %1059 = vmatprep.subr.mxu0 0.0
      %1060 = vmatpush1.msra.mxu0 0.0
      %1061 = vmatprep.subr.mxu0 0.0
      %1062 = vmatpush1.msra.mxu0 0.0
      %1063 = vmatprep.subr.mxu0 0.0
      %1064 = vmatpush1.msra.mxu0 0.0
      %1065 = vmatprep.mubr.f32.mxu0 0.0
      %1066 = vmatmul.mubr.f32.gmra.mrb[0].mxu0 %v999
      %v1067 = vpop.f32.mrb[0].mxu0
      %v1068 = vadd.f32 %v870, %v1067
      %v1069 = vpop.f32.mrb[0].mxu0
      %v1070 = vadd.f32 %v870, %v1069
      %1071 = vdwg.mxu0
      %1072 = vmatprep.subr.mxu0 0.0
      %1073 = vmatpush1.msra.mxu0 %v946
      %1074 = vmatprep.subr.mxu0 0.0
      %1075 = vmatpush1.msra.mxu0 %v949
      %1076 = vmatprep.subr.mxu0 0.0
      %1077 = vmatpush1.msra.mxu0 %v952
      %1078 = vmatprep.subr.mxu0 0.0
      %1079 = vmatpush1.msra.mxu0 %v955
      %1080 = vmatprep.subr.mxu0 0.0
      %1081 = vmatpush1.msra.mxu0 %v958
      %1082 = vmatprep.subr.mxu0 0.0
      %1083 = vmatpush1.msra.mxu0 %v961
      %1084 = vmatprep.subr.mxu0 0.0
      %1085 = vmatpush1.msra.mxu0 %v964
      %1086 = vmatprep.subr.mxu0 0.0
      %1087 = vmatpush1.msra.mxu0 %v967
      %1088 = vmatprep.subr.mxu0 0.0
      %1089 = vmatpush1.msra.mxu0 %v970
      %1090 = vmatprep.subr.mxu0 0.0
      %1091 = vmatpush1.msra.mxu0 0.0
      %1092 = vmatprep.subr.mxu0 0.0
      %1093 = vmatpush1.msra.mxu0 0.0
      %1094 = vmatprep.subr.mxu0 0.0
      %1095 = vmatpush1.msra.mxu0 0.0
      %1096 = vmatprep.subr.mxu0 0.0
      %1097 = vmatpush1.msra.mxu0 0.0
      %1098 = vmatprep.subr.mxu0 0.0
      %1099 = vmatpush1.msra.mxu0 0.0
      %1100 = vmatprep.subr.mxu0 0.0
      %1101 = vmatpush1.msra.mxu0 0.0
      %1102 = vmatprep.subr.mxu0 0.0
      %1103 = vmatpush1.msra.mxu0 0.0
      %1104 = vmatprep.subr.mxu0 0.0
      %1105 = vmatpush1.msra.mxu0 0.0
      %1106 = vmatprep.subr.mxu0 0.0
      %1107 = vmatpush1.msra.mxu0 0.0
      %1108 = vmatprep.subr.mxu0 0.0
      %1109 = vmatpush1.msra.mxu0 0.0
      %1110 = vmatprep.subr.mxu0 0.0
      %1111 = vmatpush1.msra.mxu0 0.0
      %1112 = vmatprep.subr.mxu0 0.0
      %1113 = vmatpush1.msra.mxu0 0.0
      %1114 = vmatprep.subr.mxu0 0.0
      %1115 = vmatpush1.msra.mxu0 0.0
      %1116 = vmatprep.subr.mxu0 0.0
      %1117 = vmatpush1.msra.mxu0 0.0
      %1118 = vmatprep.subr.mxu0 0.0
      %1119 = vmatpush1.msra.mxu0 0.0
      %1120 = vmatprep.subr.mxu0 0.0
      %1121 = vmatpush1.msra.mxu0 0.0
      %1122 = vmatprep.subr.mxu0 0.0
      %1123 = vmatpush1.msra.mxu0 0.0
      %1124 = vmatprep.subr.mxu0 0.0
      %1125 = vmatpush1.msra.mxu0 0.0
      %1126 = vmatprep.subr.mxu0 0.0
      %1127 = vmatpush1.msra.mxu0 0.0
      %1128 = vmatprep.subr.mxu0 0.0
      %1129 = vmatpush1.msra.mxu0 0.0
      %1130 = vmatprep.subr.mxu0 0.0
      %1131 = vmatpush1.msra.mxu0 0.0
      %1132 = vmatprep.subr.mxu0 0.0
      %1133 = vmatpush1.msra.mxu0 0.0
      %1134 = vmatprep.subr.mxu0 0.0
      %1135 = vmatpush1.msra.mxu0 0.0
      %1136 = vmatprep.mubr.f32.mxu0 0.0
      %1137 = vmatmul.mubr.f32.gmra.mrb[0].mxu0 %v999
      %v1138 = vpop.f32.mrb[0].mxu0
      %v1139 = vadd.f32 %v870, %v1138
      %v1140 = vpop.f32.mrb[0].mxu0
      %1141 = vdwg.mxu0
      %v1142 = vmul.f32 %v1068, %v750
      %v1143 = vmul.f32 %v1070, %v754
      %v1144 = vmul.f32 %v1139, %v758
      %v1145 = vadd.f32 %v1142, %v1143
      %v1146 = vadd.f32 %v1145, %v1144
      %1147 = vadd.xlane.f32.xlu0 %v1146
      %v1148 = vpop.xlane.xlu0 %1147
      %v1149 = vmul.f32 %v1148, 0.00390625
      %v1150 = vld [vmem:[%s5] sm:$0xff]
      %v1151 = vmul.f32 %v1150, %v1149
      %vm1152 = vcmask 15360
      %v1153 = vsel %vm1152, %v1151, 0.0
      %v1154 = vrot.slane %v1153, 4
      %v1155 = vadd.f32 %v1153, %v1154
      %v1156 = vrot.slane %v1155, 2
      %v1157 = vadd.f32 %v1155, %v1156
      %v1158 = vrot.slane %v1157, 1
      %v1159 = vadd.f32 %v1157, %v1158
      %v1160 = vld [vmem:[%s6] sm:$0x1]
      %v1161 = vadd.f32 %v1159, %v1160
      %v1162 = vmax.f32 %v1161, 0.0
      %v1163 = vld [vmem:[%s7] sm:$0xff]
      %v1164 = vlaneseq
      %v1165 = vshrl.u32 %v1164, 7
      %v1166 = vsub.s32 0, %v1165
      %v1167 = vrot.slane %v1162, %v1166
      %v1168 = vmul.f32 %v1163, %v1167
      %v1169 = vsel %vm1152, %v1168, 0.0
      %1170 = vadd.xlane.f32.xlu0 %v1169
      %v1171 = vpop.xlane.xlu0 %1170
      %v1172 = vld [vmem:[%s8] sm:$0xff]
      %v1173 = vadd.f32 %v1171, %v1172
      %v1174 = vsub.f32 0.0, %v1173
      %v1175 = vmul.f32 %v1174, 1.442695
      %v1176 = vpow.pop %v1175
      %v1177 = vadd.f32 %v1176, 1.0
      %v1178 = vrcp.pop %v1177
      %v1179 = vmul.f32 1.0, %v1178
      %v1180 = vld [vmem:[%s354 + $0x8] sm:$0xff]
      %v1181 = vld [vmem:[%s354 + $0x10] sm:$0xff]
      %v1182 = vld [vmem:[%s354 + $0x18] sm:$0xff]
      %1184 = vset.pattern.permute.xlu0 0
      %1185 = vperm.xlu0 %1184, %v1179
      %v1186 = vpop.permute.xlu0 %1185
      %v1188 = vmul.f32 %v1142, %v1186
      %v1189 = vmul.f32 %v1143, %v1186
      %v1190 = vmul.f32 %v1144, %v1186
      %v1191 = vadd.f32 %v1188, %v1180
      %v1192 = vadd.f32 %v1189, %v1181
      %v1193 = vadd.f32 %v1190, %v1182
      %1194 = vst [vmem:[%s359] sm:$0xff] %v1191
      %1195 = vst [vmem:[%s359 + $0x8] sm:$0xff] %v1192
      %1196 = vst [vmem:[%s359 + $0x10] sm:$0xff] %v1193
      %p1197 = scmp.lt.s32.totalorder %s21, 1
      %s1198 = scalar_select %p1197, %s21, 1
      %s1199 = smul.addr %s1198, 3
      %s1200 = smul.addr %s1199, 8
      %s1201 = scalar_lea.vmem %s10, %s1200
      // Predicated region
      $region61: #{cab_pallas.1} parent=59 // pred_check
        %p1202 = pneg %p254
      $region62: #{cab_pallas.1} parent=59 // pred_check_branch
        %1204 = sbr.rel (%p1202) target = $region64
      $region63: #{cab_pallas.1} parent=59 // pred_region
        _
      $region64: #{cab_pallas.1} parent=59 // pred_fallthru
        _
    $region60: #{cab_pallas.1} parent=5 // pred_fallthru
      _
    %p1205 = scmp.le.s32.totalorder 2, %s16
    // Predicated region
    $region65: #{cab_pallas.1} parent=5 // pred_check
      %p1206 = pneg %p1205
    $region66: #{cab_pallas.1} parent=5 // pred_check_branch
      %1208 = sbr.rel (%p1206) target = $region68
    $region67: #{cab_pallas.1} parent=5 // pred_region
      %s1209 = ssub.s32 %s16, 2
      // Predicated region
      $region69: #{cab_pallas.1} parent=67 // pred_check
        %p1210 = pneg %p260
      $region70: #{cab_pallas.1} parent=67 // pred_check_branch
        %1212 = sbr.rel (%p1210) target = $region72
      $region71: #{cab_pallas.1} parent=67 // pred_region
        %p1213 = scmp.lt.s32.totalorder %s22, 1
        %s1214 = scalar_select %p1213, %s22, 1
        %s1215 = smul.addr %s1214, 3
        %s1216 = smul.addr %s1215, 8
        %s1217 = scalar_lea.vmem %s10, %s1216
      $region72: #{cab_pallas.1} parent=67 // pred_fallthru
        _
    $region68: #{cab_pallas.1} parent=5 // pred_fallthru
      _
  $region6: #{cab_pallas.1} parent=0 // loop_footer
    %s20 = sadd.s32 1, %s16
  $region7: #{cab_pallas.1} parent=0 // loop_footer_branch
    %15 = sbr.rel target = $region3
  $region8: #{cab_pallas.1} parent=0 // loop_exit
    _

</llo_original>
